<compile_context>
chip_gen: v5e
topology: v5e:2x2
jax: 0.10.0
libtpu: 0.0.40
codegen_flags: <defaults>
</compile_context>

<pallas_src>
import functools

import jax
import jax.numpy as jnp
from jax.experimental import pallas as pl
from jax.experimental.pallas import tpu as pltpu


def _round_up(n, m):
    return ((n + m - 1) // m) * m


# ---------------------------------------------------------------------------
# Fused kernel
#   patches : [B*H*W, K]        (bf16, K = 9*Cin)
#   w_conv  : [K, Cmid_p]       (bf16, Cmid_p multiple of 128)
#   b_conv  : [1, Cmid_p]       (f32)
#   w_head  : [Cmid_p, NC_p]    (f32, NC_p multiple of 128)
#   b_head  : [1, NC_p]         (f32)
#   out     : [B, 1, NC_p]      (f32 logits, padded)
# grid = (B, HW // TM); per-batch pooled sum lives in VMEM scratch.
# ---------------------------------------------------------------------------
def fused_cls_kernel(p_ref, wc_ref, bc_ref, wh_ref, bh_ref, o_ref, acc_ref, *,
                     inv_hw):
    m = pl.program_id(1)

    @pl.when(m == 0)
    def _init():
        acc_ref[...] = jnp.zeros_like(acc_ref)

    # conv tile as im2col matmul on the MXU: [TM, K] @ [K, Cmid_p] -> f32
    feats = jnp.dot(p_ref[...], wc_ref[...], preferred_element_type=jnp.float32)
    feats = jnp.maximum(feats + bc_ref[...], 0.0)

    # partial global-average-pool: accumulate the spatial sum for this batch elem
    acc_ref[...] += jnp.sum(feats, axis=0, keepdims=True)        # [1, Cmid_p]

    @pl.when(m == pl.num_programs(1) - 1)
    def _finalize():
        pooled = acc_ref[...] * inv_hw                           # [1, Cmid_p]
        logits = jnp.dot(pooled, wh_ref[...],
                         preferred_element_type=jnp.float32)     # [1, NC_p]
        o_ref[...] = (logits + bh_ref[...])[None].astype(o_ref.dtype)


def fused_classifier_pallas(patches, w_conv, b_conv, w_head, b_head, *, B, HW, tm):
    M, K = patches.shape
    assert M == B * HW
    assert HW % tm == 0 and tm % 8 == 0
    Cmid_p = w_conv.shape[1]
    NC_p = w_head.shape[1]
    mt = HW // tm
    inv_hw = 1.0 / float(HW)

    kernel = functools.partial(fused_cls_kernel, inv_hw=inv_hw)

    grid_spec = pltpu.PrefetchScalarGridSpec(
        num_scalar_prefetch=0,
        grid=(B, mt),
        in_specs=[
            # patches: tiled over rows; row-block index = b*mt + m
            pl.BlockSpec((tm, K), lambda b, m, mt=mt: (b * mt + m, 0)),
            # weights / biases: grid-invariant (tiny, stay resident)
            pl.BlockSpec((K, Cmid_p), lambda b, m: (0, 0)),
            pl.BlockSpec((1, Cmid_p), lambda b, m: (0, 0)),
            pl.BlockSpec((Cmid_p, NC_p), lambda b, m: (0, 0)),
            pl.BlockSpec((1, NC_p), lambda b, m: (0, 0)),
        ],
        out_specs=pl.BlockSpec((1, 1, NC_p), lambda b, m: (b, 0, 0)),
        scratch_shapes=[pltpu.VMEM((1, Cmid_p), jnp.float32)],
    )

    return pl.pallas_call(
        kernel,
        out_shape=jax.ShapeDtypeStruct((B, 1, NC_p), jnp.float32),
        grid_spec=grid_spec,
        compiler_params=pltpu.CompilerParams(
            # b is independent (shards across v7x's 2 TCs); m is the pool
            # reduction carried in the VMEM scratch accumulator.
            dimension_semantics=("parallel", "arbitrary"),
            # tiles here are tiny (~hundreds of KB); 32 MiB leaves ample
            # headroom even on v7x (64 MiB physical VMEM per TC).
            vmem_limit_bytes=32 * 1024 * 1024,
        ),
    )(patches, w_conv, b_conv, w_head, b_head)


# ---------------------------------------------------------------------------
# Parameter init (deterministic) + host-side prep + forward wrapper
# ---------------------------------------------------------------------------
def init_params(key, cin, cmid, num_classes, kh=3, kw=3):
    k1, k2, k3, k4 = jax.random.split(key, 4)
    w_conv_oihw = jax.random.normal(k1, (cmid, cin, kh, kw), jnp.float32) * 0.05
    b_conv = jax.random.normal(k2, (cmid,), jnp.float32) * 0.05
    w_head = jax.random.normal(k3, (num_classes, cmid), jnp.float32) * 0.05
    b_head = jax.random.normal(k4, (num_classes,), jnp.float32) * 0.05
    return dict(w_conv=w_conv_oihw, b_conv=b_conv, w_head=w_head, b_head=b_head)


def im2col_3x3_same(x_nhwc):
    """x: [B,H,W,C] -> patches [B*H*W, 9*C] ((kh,kw,c) ordering), pad=1 stride=1."""
    B, H, W, C = x_nhwc.shape
    xp = jnp.pad(x_nhwc, ((0, 0), (1, 1), (1, 1), (0, 0)))
    cols = [xp[:, kh:kh + H, kw:kw + W, :] for kh in range(3) for kw in range(3)]
    patches = jnp.stack(cols, axis=3)                  # [B, H, W, 9, C]
    return patches.reshape(B * H * W, 9 * C)


def forward(params, x_nchw, *, tm=128):
    B, Cin, H, W = x_nchw.shape
    Cmid = params["w_conv"].shape[0]
    NC = params["w_head"].shape[0]
    Cmid_p = _round_up(max(Cmid, 128), 128)            # lane-dense conv channels
    NC_p = _round_up(max(NC, 128), 128)                # lane-dense logits

    x_nhwc = jnp.transpose(x_nchw, (0, 2, 3, 1))       # NCHW -> NHWC

    # conv weight OIHW -> [9*Cin, Cout] with (kh,kw,cin) ordering (matches
    # im2col patch ordering), zero-padded to Cmid_p, bf16 for the MXU.
    w_conv = jnp.transpose(params["w_conv"], (2, 3, 1, 0)).reshape(9 * Cin, Cmid)
    w_conv = jnp.pad(w_conv, ((0, 0), (0, Cmid_p - Cmid))).astype(jnp.bfloat16)
    b_conv = jnp.pad(params["b_conv"].reshape(1, Cmid),
                     ((0, 0), (0, Cmid_p - Cmid))).astype(jnp.float32)

    w_head = jnp.pad(params["w_head"].T,
                     ((0, Cmid_p - Cmid), (0, NC_p - NC))).astype(jnp.float32)
    b_head = jnp.pad(params["b_head"].reshape(1, NC),
                     ((0, 0), (0, NC_p - NC))).astype(jnp.float32)

    # bf16 patches halve HBM traffic for the conv stage (f32 accumulation in-kernel).
    patches = im2col_3x3_same(x_nhwc).astype(jnp.bfloat16)      # [B*H*W, 9*Cin]

    HW = H * W
    tm_eff = tm if (HW % tm == 0) else HW              # fallback: one tile per image
    logits_p = fused_classifier_pallas(
        patches, w_conv, b_conv, w_head, b_head, B=B, HW=HW, tm=tm_eff)
    return logits_p.reshape(B, NC_p)[:, :NC]


def reference_forward(params, x_nchw):
    """Pure-jnp reference (f32) for correctness checking."""
    B, Cin, H, W = x_nchw.shape
    x_nhwc = jnp.transpose(x_nchw, (0, 2, 3, 1))
    w = jnp.transpose(params["w_conv"], (2, 3, 1, 0)).reshape(9 * Cin, -1)
    p = im2col_3x3_same(x_nhwc)
    f = jnp.maximum(p @ w + params["b_conv"][None, :], 0.0)
    pooled = f.reshape(B, H * W, -1).mean(axis=1)
    return pooled @ params["w_head"].T + params["b_head"][None, :]


if __name__ == "__main__":
    key = jax.random.PRNGKey(0)
    kx, kp = jax.random.split(key)

    B, Cin, H, W = 2, 4, 16, 16
    Cmid, num_classes = 32, 10

    x = jax.random.normal(kx, (B, Cin, H, W), jnp.float32)
    params = init_params(kp, Cin, Cmid, num_classes)

    out = jax.block_until_ready(forward(params, x))

    assert out.shape == (B, num_classes), out.shape
    assert bool(jnp.all(jnp.isfinite(out)))

    ref = reference_forward(params, x)
    assert bool(jnp.allclose(out, ref, rtol=5e-2, atol=5e-2)), (
        float(jnp.max(jnp.abs(out - ref))))

    print("KERNEL_OK")
</pallas_src>

<mosaic_0001>
module attributes {stable_mosaic.version = 11 : i64} {
  func.func @fused_cls_kernel(%arg0: i32, %arg1: i32, %arg2: memref<128x36xbf16, #tpu.memory_space<vmem>>, %arg3: memref<36x128xbf16, #tpu.memory_space<vmem>>, %arg4: memref<1x128xf32, #tpu.memory_space<vmem>>, %arg5: memref<128x128xf32, #tpu.memory_space<vmem>>, %arg6: memref<1x128xf32, #tpu.memory_space<vmem>>, %arg7: memref<1x1x128xf32, #tpu.memory_space<vmem>>, %arg8: memref<1x128xf32, #tpu.memory_space<vmem>>) attributes {dimension_semantics = [#tpu.dimension_semantics<parallel>, #tpu.dimension_semantics<arbitrary>], iteration_bounds = array<i64: 2, 2>, scalar_prefetch = 0 : i64, scratch_operands = 1 : i64, tpu.core_type = #tpu.core_type<tc>, window_params = [{transform_indices = @transform_0, window_bounds = array<i64: 128, 36>}, {pipeline_mode = #tpu.pipeline_mode<synchronous>, transform_indices = @transform_1, window_bounds = array<i64: 36, 128>}, {pipeline_mode = #tpu.pipeline_mode<synchronous>, transform_indices = @transform_2, window_bounds = array<i64: 1, 128>}, {pipeline_mode = #tpu.pipeline_mode<synchronous>, transform_indices = @transform_3, window_bounds = array<i64: 128, 128>}, {pipeline_mode = #tpu.pipeline_mode<synchronous>, transform_indices = @transform_4, window_bounds = array<i64: 1, 128>}, {transform_indices = @transform_5, window_bounds = array<i64: 1, 1, 128>}]} {
    %c0_i32 = arith.constant 0 : i32
    %0 = arith.cmpi eq, %arg1, %c0_i32 : i32
    %1 = arith.extui %0 : i1 to i32
    %c0_i32_0 = arith.constant 0 : i32
    %2 = arith.cmpi ne, %1, %c0_i32_0 : i32
    scf.if %2 {
      %cst_13 = arith.constant 0.000000e+00 : f32
      %19 = vector.broadcast %cst_13 : f32 to vector<1x128xf32>
      %c0_14 = arith.constant 0 : index
      %c0_15 = arith.constant 0 : index
      %20 = vector.load %arg8[%c0_14, %c0_15] : memref<1x128xf32, #tpu.memory_space<vmem>>, vector<1x128xf32>
      tpu.vector_store %arg8[%c0_14, %c0_15], %19 {strides = array<i32>} : memref<1x128xf32, #tpu.memory_space<vmem>>, vector<1x128xf32>,
    } else {
    }
    %c0 = arith.constant 0 : index
    %c0_1 = arith.constant 0 : index
    %3 = vector.load %arg2[%c0, %c0_1] : memref<128x36xbf16, #tpu.memory_space<vmem>>, vector<128x36xbf16>
    %c0_2 = arith.constant 0 : index
    %c0_3 = arith.constant 0 : index
    %4 = vector.load %arg3[%c0_2, %c0_3] : memref<36x128xbf16, #tpu.memory_space<vmem>>, vector<36x128xbf16>
    %cst = arith.constant dense<0.000000e+00> : vector<128x128xf32>
    %5 = tpu.matmul %3, %4, %cst {dimension_numbers = #tpu.dot_dimension_numbers<[1], [0], [0], [1], [0, 0, 1, 1], [], []>} : vector<128x36xbf16>, vector<36x128xbf16>, vector<128x128xf32> -> vector<128x128xf32>
    %c0_4 = arith.constant 0 : index
    %c0_5 = arith.constant 0 : index
    %6 = vector.load %arg4[%c0_4, %c0_5] : memref<1x128xf32, #tpu.memory_space<vmem>>, vector<1x128xf32>
    %7 = vector.broadcast %6 : vector<1x128xf32> to vector<128x128xf32>
    %8 = arith.addf %5, %7 : vector<128x128xf32>
    %cst_6 = arith.constant 0.000000e+00 : f32
    %9 = vector.broadcast %cst_6 : f32 to vector<128x128xf32>
    %10 = arith.maximumf %8, %9 : vector<128x128xf32>
    %c0_7 = arith.constant 0 : index
    %c0_8 = arith.constant 0 : index
    %11 = vector.load %arg8[%c0_7, %c0_8] : memref<1x128xf32, #tpu.memory_space<vmem>>, vector<1x128xf32>
    %cst_9 = arith.constant dense<0.000000e+00> : vector<128xf32>
    %12 = vector.multi_reduction <add>, %10, %cst_9 [0] : vector<128x128xf32> to vector<128xf32>
    %13 = vector.shape_cast %12 : vector<128xf32> to vector<1x128xf32>
    %14 = arith.addf %11, %13 : vector<1x128xf32>
    %c0_10 = arith.constant 0 : index
    %c0_11 = arith.constant 0 : index
    %15 = vector.load %arg8[%c0_10, %c0_11] : memref<1x128xf32, #tpu.memory_space<vmem>>, vector<1x128xf32>
    tpu.vector_store %arg8[%c0_10, %c0_11], %14 {strides = array<i32>} : memref<1x128xf32, #tpu.memory_space<vmem>>, vector<1x128xf32>,
    %c1_i32 = arith.constant 1 : i32
    %16 = arith.cmpi eq, %arg1, %c1_i32 : i32
    %17 = arith.extui %16 : i1 to i32
    %c0_i32_12 = arith.constant 0 : i32
    %18 = arith.cmpi ne, %17, %c0_i32_12 : i32
    scf.if %18 {
      %c0_13 = arith.constant 0 : index
      %c0_14 = arith.constant 0 : index
      %19 = vector.load %arg8[%c0_13, %c0_14] : memref<1x128xf32, #tpu.memory_space<vmem>>, vector<1x128xf32>
      %cst_15 = arith.constant 3.906250e-03 : f32
      %20 = vector.broadcast %cst_15 : f32 to vector<1x128xf32>
      %21 = arith.mulf %19, %20 : vector<1x128xf32>
      %c0_16 = arith.constant 0 : index
      %c0_17 = arith.constant 0 : index
      %22 = vector.load %arg5[%c0_16, %c0_17] : memref<128x128xf32, #tpu.memory_space<vmem>>, vector<128x128xf32>
      %cst_18 = arith.constant dense<0.000000e+00> : vector<1x128xf32>
      %23 = tpu.matmul %21, %22, %cst_18 {dimension_numbers = #tpu.dot_dimension_numbers<[1], [0], [0], [1], [0, 0, 1, 1], [], []>} : vector<1x128xf32>, vector<128x128xf32>, vector<1x128xf32> -> vector<1x128xf32>
      %c0_19 = arith.constant 0 : index
      %c0_20 = arith.constant 0 : index
      %24 = vector.load %arg6[%c0_19, %c0_20] : memref<1x128xf32, #tpu.memory_space<vmem>>, vector<1x128xf32>
      %25 = arith.addf %23, %24 : vector<1x128xf32>
      %26 = vector.shape_cast %25 : vector<1x128xf32> to vector<1x1x128xf32>
      %c0_21 = arith.constant 0 : index
      %c0_22 = arith.constant 0 : index
      %c0_23 = arith.constant 0 : index
      %27 = vector.load %arg7[%c0_21, %c0_22, %c0_23] : memref<1x1x128xf32, #tpu.memory_space<vmem>>, vector<1x1x128xf32>
      tpu.vector_store %arg7[%c0_21, %c0_22, %c0_23], %26 {strides = array<i32>} : memref<1x1x128xf32, #tpu.memory_space<vmem>>, vector<1x1x128xf32>,
    } else {
    }
    return
  }
  func.func @transform_0(%arg0: i32, %arg1: i32) -> (i32, i32) {
    %c2_i32 = arith.constant 2 : i32
    %0 = arith.muli %arg0, %c2_i32 : i32
    %1 = arith.addi %0, %arg1 : i32
    %c0_i32 = arith.constant 0 : i32
    %c0_i32_0 = arith.constant 0 : i32
    return %1, %c0_i32 : i32, i32
  }
  func.func @transform_1(%arg0: i32, %arg1: i32) -> (i32, i32) {
    %c0_i32 = arith.constant 0 : i32
    %c0_i32_0 = arith.constant 0 : i32
    %c0_i32_1 = arith.constant 0 : i32
    return %c0_i32, %c0_i32_0 : i32, i32
  }
  func.func @transform_2(%arg0: i32, %arg1: i32) -> (i32, i32) {
    %c0_i32 = arith.constant 0 : i32
    %c0_i32_0 = arith.constant 0 : i32
    %c0_i32_1 = arith.constant 0 : i32
    return %c0_i32, %c0_i32_0 : i32, i32
  }
  func.func @transform_3(%arg0: i32, %arg1: i32) -> (i32, i32) {
    %c0_i32 = arith.constant 0 : i32
    %c0_i32_0 = arith.constant 0 : i32
    %c0_i32_1 = arith.constant 0 : i32
    return %c0_i32, %c0_i32_0 : i32, i32
  }
  func.func @transform_4(%arg0: i32, %arg1: i32) -> (i32, i32) {
    %c0_i32 = arith.constant 0 : i32
    %c0_i32_0 = arith.constant 0 : i32
    %c0_i32_1 = arith.constant 0 : i32
    return %c0_i32, %c0_i32_0 : i32, i32
  }
  func.func @transform_5(%arg0: i32, %arg1: i32) -> (i32, i32, i32) {
    %c0_i32 = arith.constant 0 : i32
    %c0_i32_0 = arith.constant 0 : i32
    %c0_i32_1 = arith.constant 0 : i32
    return %arg0, %c0_i32, %c0_i32_0 : i32, i32, i32
  }
}

</mosaic_0001>

<llo_original>
// kernel: tpu_custom_call.1
$region0: #{tpu_custom_call.1}
  #allocation0 [shape = 'u32[]', space=smem, size = 0x4, offset = 0x4, fixed_abs, tag = 'smem constant byte address 0x4 - core index']
  #allocation1 [shape = 'u32[72,128]{1,0:T(1,128)}', space=vmem, size = 0x9000, scoped, tag = 'internal scratch']
  #allocation2 [shape = 'f32[1,128]{1,0:T(1,128)}', space=vmem, size = 0x200, scoped, tag = 'scratch operand']
  %s0 = inlined_call_operand.vmem [shape: bf16[512,36], index: 0, kind: input, shape index: {}]
  %s1 = inlined_call_operand.vmem [shape: bf16[36,128], index: 1, kind: input, shape index: {}]
  %s2 = inlined_call_operand.vmem [shape: f32[1,128], index: 2, kind: input, shape index: {}]
  %s3 = inlined_call_operand.vmem [shape: f32[128,128], index: 3, kind: input, shape index: {}]
  %s4 = inlined_call_operand.vmem [shape: f32[1,128], index: 4, kind: input, shape index: {}]
  %s5 = inlined_call_operand.hbm [shape: f32[2,1,128], index: 5, kind: output, shape index: {}]
  %s6 = sld [smem:[#allocation0]]
  $region61: #{tpu_custom_call.1} parent=0
    _
  %s8 = ssub.s32 1, %s6
  %s9 = scalar_select 0, %s8, %s6
  $region1: #{tpu_custom_call.1} parent=0
    #allocation3 [shape = 'u8[1024]{0}', space=vmem, size = 0x400, scoped, tag = 'output window, operand 0']
    #allocation4 [shape = 's32[2]{0}', space=sflag, size = 0x8, scoped, tag = 'scoped memory for tpu_custom_call.1']
    %10 = vsyncpa [#allocation4], 0
    %s11 = scalar_lea.sflag [#allocation4], 1
    %12 = vsyncpa %s11, 0
    loop: start=0, step=1, limit=6
    $region2: #{tpu_custom_call.1} parent=1 // loop_pre_header
      _
    $region3: #{tpu_custom_call.1} parent=1 // loop_header
      %s14 = sphi 0, %s18
      %p15 = scmp.ge.s32.totalorder %s14, 6
      %s21 = sphi 0, %s33
      %s22 = sphi 0, %s29
      %s23 = sphi 0, %s21
      %s24 = sphi 0, %s22
      %s25 = sphi 0, %s23
      %s26 = sphi 0, %s24
      %s40 = sphi 0, %s42
      %s43 = sphi 0, %s40
      %s44 = sphi 0, %s43
      %s60 = sphi 0, %s44
      %s64 = sphi 0, %s64
      %s66 = sphi 0, %s64
      %s67 = sphi 0, %s66
      %s81 = sphi 0, %s67
      %s85 = sphi 0, %s85
      %s87 = sphi 0, %s85
      %s88 = sphi 0, %s87
      %s102 = sphi 0, %s88
      %s106 = sphi 0, %s106
      %s108 = sphi 0, %s106
      %s109 = sphi 0, %s108
      %s123 = sphi 0, %s109
      %s127 = sphi 0, %s127
      %s129 = sphi 0, %s127
      %s130 = sphi 0, %s129
      %s144 = sphi 0, %s130
      %s150 = sphi 0, %s152
      %s153 = sphi 0, %s150
      %s154 = sphi 0, %s153
      %s170 = sphi 0, %s154
    $region4: #{tpu_custom_call.1} parent=1 // loop_header_branch
      %17 = sbr.rel (%p15) target = $region8
    $region5: #{tpu_custom_call.1} parent=1 // loop_body
      %s19 = ssub.s32 %s14, 1
      %s20 = ssub.s32 %s14, 2
      %s27 = sadd.s32 1, %s22
      %p28 = scmp.ge.s32.totalorder %s27, 2
      %s29 = scalar_select %p28, 0, %s27
      %s30 = sadd.s32 1, %s21
      %s31 = scalar_select %p28, %s30, %s21
      %p32 = scmp.ge.s32.totalorder %s31, 2
      %s33 = scalar_select %p32, 0, %s31
      %s34 = smul.u32 %s21, 2
      %s35 = sadd.s32 %s34, %s22
      %s36 = smul.u32 %s33, 2
      %s37 = sadd.s32 %s36, %s29
      %s38 = ssub.s32 %s35, %s37
      %p39 = scmp.eq.s32.totalorder %s38, 0
      %s41 = sadd.s32 %s40, 1
      %s42 = scalar_select %p39, %s40, %s41
      %p45 = pneg %p39
      %p46 = scmp.eq.s32.totalorder %s14, 3
      %p47 = por %p45, %p46
      %p48 = scmp.ne.s32.totalorder %s40, %s43
      %p49 = scmp.eq.s32.totalorder %s14, 0
      %p50 = por %p48, %p49
      %p51 = scmp.ne.s32.totalorder %s40, %s43
      %p52 = scmp.eq.s32.totalorder %s19, 3
      %p53 = por %p51, %p52
      %p54 = scmp.ne.s32.totalorder %s43, %s44
      %p55 = scmp.eq.s32.totalorder %s19, 0
      %p56 = por %p54, %p55
      %p57 = scmp.ne.s32.totalorder %s43, %s44
      %p58 = scmp.eq.s32.totalorder %s20, 3
      %p59 = por %p57, %p58
      %p61 = scmp.ne.s32.totalorder %s44, %s60
      %p62 = scmp.eq.s32.totalorder %s20, 0
      %p63 = por %p61, %p62
      %s65 = sadd.s32 %s64, 1
      %p68 = scmp.eq.s32.totalorder %s14, 3
      %p69 = scmp.ne.s32.totalorder %s64, %s66
      %p70 = scmp.eq.s32.totalorder %s14, 0
      %p71 = por %p69, %p70
      %p72 = scmp.ne.s32.totalorder %s64, %s66
      %p73 = scmp.eq.s32.totalorder %s19, 3
      %p74 = por %p72, %p73
      %p75 = scmp.ne.s32.totalorder %s66, %s67
      %p76 = scmp.eq.s32.totalorder %s19, 0
      %p77 = por %p75, %p76
      %p78 = scmp.ne.s32.totalorder %s66, %s67
      %p79 = scmp.eq.s32.totalorder %s20, 3
      %p80 = por %p78, %p79
      %p82 = scmp.ne.s32.totalorder %s67, %s81
      %p83 = scmp.eq.s32.totalorder %s20, 0
      %p84 = por %p82, %p83
      %s86 = sadd.s32 %s85, 1
      %p89 = scmp.eq.s32.totalorder %s14, 3
      %p90 = scmp.ne.s32.totalorder %s85, %s87
      %p91 = scmp.eq.s32.totalorder %s14, 0
      %p92 = por %p90, %p91
      %p93 = scmp.ne.s32.totalorder %s85, %s87
      %p94 = scmp.eq.s32.totalorder %s19, 3
      %p95 = por %p93, %p94
      %p96 = scmp.ne.s32.totalorder %s87, %s88
      %p97 = scmp.eq.s32.totalorder %s19, 0
      %p98 = por %p96, %p97
      %p99 = scmp.ne.s32.totalorder %s87, %s88
      %p100 = scmp.eq.s32.totalorder %s20, 3
      %p101 = por %p99, %p100
      %p103 = scmp.ne.s32.totalorder %s88, %s102
      %p104 = scmp.eq.s32.totalorder %s20, 0
      %p105 = por %p103, %p104
      %s107 = sadd.s32 %s106, 1
      %p110 = scmp.eq.s32.totalorder %s14, 3
      %p111 = scmp.ne.s32.totalorder %s106, %s108
      %p112 = scmp.eq.s32.totalorder %s14, 0
      %p113 = por %p111, %p112
      %p114 = scmp.ne.s32.totalorder %s106, %s108
      %p115 = scmp.eq.s32.totalorder %s19, 3
      %p116 = por %p114, %p115
      %p117 = scmp.ne.s32.totalorder %s108, %s109
      %p118 = scmp.eq.s32.totalorder %s19, 0
      %p119 = por %p117, %p118
      %p120 = scmp.ne.s32.totalorder %s108, %s109
      %p121 = scmp.eq.s32.totalorder %s20, 3
      %p122 = por %p120, %p121
      %p124 = scmp.ne.s32.totalorder %s109, %s123
      %p125 = scmp.eq.s32.totalorder %s20, 0
      %p126 = por %p124, %p125
      %s128 = sadd.s32 %s127, 1
      %p131 = scmp.eq.s32.totalorder %s14, 3
      %p132 = scmp.ne.s32.totalorder %s127, %s129
      %p133 = scmp.eq.s32.totalorder %s14, 0
      %p134 = por %p132, %p133
      %p135 = scmp.ne.s32.totalorder %s127, %s129
      %p136 = scmp.eq.s32.totalorder %s19, 3
      %p137 = por %p135, %p136
      %p138 = scmp.ne.s32.totalorder %s129, %s130
      %p139 = scmp.eq.s32.totalorder %s19, 0
      %p140 = por %p138, %p139
      %p141 = scmp.ne.s32.totalorder %s129, %s130
      %p142 = scmp.eq.s32.totalorder %s20, 3
      %p143 = por %p141, %p142
      %p145 = scmp.ne.s32.totalorder %s130, %s144
      %p146 = scmp.eq.s32.totalorder %s20, 0
      %p147 = por %p145, %p146
      %s148 = ssub.s32 %s21, %s33
      %p149 = scmp.eq.s32.totalorder %s148, 0
      %s151 = sadd.s32 %s150, 1
      %s152 = scalar_select %p149, %s150, %s151
      %p155 = pneg %p149
      %p156 = scmp.eq.s32.totalorder %s14, 3
      %p157 = por %p155, %p156
      %p158 = scmp.ne.s32.totalorder %s150, %s153
      %p159 = scmp.eq.s32.totalorder %s14, 0
      %p160 = por %p158, %p159
      %p161 = scmp.ne.s32.totalorder %s150, %s153
      %p162 = scmp.eq.s32.totalorder %s19, 3
      %p163 = por %p161, %p162
      %p164 = scmp.ne.s32.totalorder %s153, %s154
      %p165 = scmp.eq.s32.totalorder %s19, 0
      %p166 = por %p164, %p165
      %p167 = scmp.ne.s32.totalorder %s153, %s154
      %p168 = scmp.eq.s32.totalorder %s20, 3
      %p169 = por %p167, %p168
      %p171 = scmp.ne.s32.totalorder %s154, %s170
      %p172 = scmp.eq.s32.totalorder %s20, 0
      %p173 = por %p171, %p172
      %p174 = scmp.le.s32.totalorder 1, %s14
      %p175 = scmp.lt.s32.totalorder %s14, 5
      %p176 = pnand %p174, %p175
      %p177 = pneg %p176
      // Predicated region
      $region9: #{tpu_custom_call.1} parent=5 // pred_check
        _
      $region10: #{tpu_custom_call.1} parent=5 // pred_check_branch
        %179 = sbr.rel (%p176) target = $region12
      $region11: #{tpu_custom_call.1} parent=5 // pred_region
        %s180 = ssub.s32 %s14, 1
        // Predicated region
        $region13: #{tpu_custom_call.1} parent=11 // pred_check
          %p181 = pneg %p77
        $region14: #{tpu_custom_call.1} parent=11 // pred_check_branch
          %183 = sbr.rel (%p181) target = $region16
        $region15: #{tpu_custom_call.1} parent=11 // pred_region
          _
        $region16: #{tpu_custom_call.1} parent=11 // pred_fallthru
          _
        // Predicated region
        $region17: #{tpu_custom_call.1} parent=11 // pred_check
          %p184 = pneg %p98
        $region18: #{tpu_custom_call.1} parent=11 // pred_check_branch
          %186 = sbr.rel (%p184) target = $region20
        $region19: #{tpu_custom_call.1} parent=11 // pred_region
          _
        $region20: #{tpu_custom_call.1} parent=11 // pred_fallthru
          _
        // Predicated region
        $region21: #{tpu_custom_call.1} parent=11 // pred_check
          %p187 = pneg %p119
        $region22: #{tpu_custom_call.1} parent=11 // pred_check_branch
          %189 = sbr.rel (%p187) target = $region24
        $region23: #{tpu_custom_call.1} parent=11 // pred_region
          _
        $region24: #{tpu_custom_call.1} parent=11 // pred_fallthru
          _
        // Predicated region
        $region25: #{tpu_custom_call.1} parent=11 // pred_check
          %p190 = pneg %p140
        $region26: #{tpu_custom_call.1} parent=11 // pred_check_branch
          %192 = sbr.rel (%p190) target = $region28
        $region27: #{tpu_custom_call.1} parent=11 // pred_region
          _
        $region28: #{tpu_custom_call.1} parent=11 // pred_fallthru
          _
      $region12: #{tpu_custom_call.1} parent=5 // pred_fallthru
        _
      %p193 = scmp.lt.s32.totalorder %s14, 4
      // Predicated region
      $region29: #{tpu_custom_call.1} parent=5 // pred_check
        %p194 = pneg %p193
      $region30: #{tpu_custom_call.1} parent=5 // pred_check_branch
        %196 = sbr.rel (%p194) target = $region32
      $region31: #{tpu_custom_call.1} parent=5 // pred_region
        // Predicated region
        $region33: #{tpu_custom_call.1} parent=31 // pred_check
          %p197 = pneg %p50
        $region34: #{tpu_custom_call.1} parent=31 // pred_check_branch
          %199 = sbr.rel (%p197) target = $region36
        $region35: #{tpu_custom_call.1} parent=31 // pred_region
          %s200 = smul.u32 %s21, 2
          %s201 = sadd.s32 %s200, %s22
          %s202 = smul.u32 16, %s201
          %p203 = scmp.lt.s32.totalorder %s202, 63
          %s204 = scalar_select %p203, %s202, 63
          %s205 = smul.addr %s204, 4
          %s206 = scalar_lea.vmem %s0, %s205
          %s207 = smul.u32 %s21, 2
          %s208 = sadd.s32 %s207, %s22
          %s209 = smul.u32 16, %s208
        $region36: #{tpu_custom_call.1} parent=31 // pred_fallthru
          _
      $region32: #{tpu_custom_call.1} parent=5 // pred_fallthru
        _
      %p210 = scmp.le.s32.totalorder 1, %s14
      %p211 = scmp.lt.s32.totalorder %s14, 5
      %p212 = pnand %p210, %p211
      %p213 = pneg %p212
      // Predicated region
      $region37: #{tpu_custom_call.1} parent=5 // pred_check
        _
      $region38: #{tpu_custom_call.1} parent=5 // pred_check_branch
        %215 = sbr.rel (%p212) target = $region40
      $region39: #{tpu_custom_call.1} parent=5 // pred_region
        %s216 = ssub.s32 %s14, 1
        %s217 = smul.u32 %s23, 2
        %s218 = sadd.s32 %s217, %s24
        %s219 = smul.u32 16, %s218
        %p220 = scmp.lt.s32.totalorder %s219, 63
        %s221 = scalar_select %p220, %s219, 63
        %s222 = smul.addr %s221, 4
        %s223 = scalar_lea.vmem %s0, %s222
        %p224 = pneg %p56
        %p225 = pneg %p53
        %p226 = pneg %p77
        %p227 = pneg %p74
        %p228 = pneg %p98
        %p229 = pneg %p95
        %p230 = pneg %p119
        %p231 = pneg %p116
        %p232 = pneg %p140
        %p233 = pneg %p137
        %p234 = pneg %p166
        %p235 = pneg %p163
        %s236 = sand.u32 %s153, 1
        %s237 = scalar_lea.sflag [#allocation4], %s236
        %s238 = sand.u32 %s153, 1
        %s239 = scalar_lea.vmem [#allocation3], %s238
        %s240 = smul.u32 %s23, 2
        %s241 = sadd.s32 %s240, %s24
        %s242 = smul.u32 16, %s241
        %p243 = scmp.lt.s32.totalorder %s242, 63
        %s244 = scalar_select %p243, %s242, 63
        %s245 = smul.addr %s244, 4
        %s246 = scalar_lea.vmem %s0, %s245
        %s247 = smul.u32 %s23, 2
        %s248 = sadd.s32 %s247, %s24
        %s249 = smul.u32 16, %s248
        %p251 = scmp.eq.s32.totalorder %s24, 0
        // Predicated region
        $region41: #{tpu_custom_call.1} parent=39 // pred_check
          %p252 = pneg %p251
        $region42: #{tpu_custom_call.1} parent=39 // pred_check_branch
          %254 = sbr.rel (%p252) target = $region44
        $region43: #{tpu_custom_call.1} parent=39 // pred_region
          %255 = vst [vmem:[#allocation2] sm:$0x1] 0.0
        $region44: #{tpu_custom_call.1} parent=39 // pred_fallthru
          _
        %v256 = vld [vmem:[%s246] sm:$0xf]
        %v257 = vld [vmem:[%s246 + $0x4] sm:$0xf]
        %v258 = vld [vmem:[%s246 + $0x8] sm:$0xf]
        %v259 = vld [vmem:[%s246 + $0xc] sm:$0xf]
        %v260 = vld [vmem:[%s246 + $0x10] sm:$0xf]
        %v261 = vld [vmem:[%s246 + $0x14] sm:$0xf]
        %v262 = vld [vmem:[%s246 + $0x18] sm:$0xf]
        %v263 = vld [vmem:[%s246 + $0x1c] sm:$0xf]
        %v264 = vld [vmem:[%s246 + $0x20] sm:$0xf]
        %v265 = vld [vmem:[%s246 + $0x24] sm:$0xf]
        %v266 = vld [vmem:[%s246 + $0x28] sm:$0xf]
        %v267 = vld [vmem:[%s246 + $0x2c] sm:$0xf]
        %v268 = vld [vmem:[%s246 + $0x30] sm:$0xf]
        %v269 = vld [vmem:[%s246 + $0x34] sm:$0xf]
        %v270 = vld [vmem:[%s246 + $0x38] sm:$0xf]
        %v271 = vld [vmem:[%s246 + $0x3c] sm:$0xf]
        %v272 = vld [vmem:[%s1] sm:$0xf]
        %v273 = vld [vmem:[%s1 + $0x4] sm:$0xf]
        %v274 = vld [vmem:[%s1 + $0x8] sm:$0xf]
        %v275 = vld [vmem:[%s1 + $0xc] sm:$0xf]
        %v276 = vld [vmem:[%s1 + $0x10] sm:$0x3]
        %v277 = vld [vmem:[%s2] sm:$0x1]
        %v279 = vperm.slane %v277, 0
        %v297 = vunpack.c.l.b16 %v256
        %v298 = vunpack.c.l.b16 %v257
        %v299 = vunpack.c.l.b16 %v258
        %v300 = vunpack.c.l.b16 %v259
        %v301 = vunpack.c.l.b16 %v260
        %v302 = vunpack.c.l.b16 %v261
        %v303 = vunpack.c.l.b16 %v262
        %v304 = vunpack.c.l.b16 %v263
        %v305 = vunpack.c.l.b16 %v264
        %v306 = vunpack.c.l.b16 %v265
        %v307 = vunpack.c.l.b16 %v266
        %v308 = vunpack.c.l.b16 %v267
        %v309 = vunpack.c.l.b16 %v268
        %v310 = vunpack.c.l.b16 %v269
        %v311 = vunpack.c.l.b16 %v270
        %v312 = vunpack.c.l.b16 %v271
        %v313 = vpack.c.b16 %v298, %v297
        %v314 = vpack.c.b16 %v300, %v299
        %v315 = vpack.c.b16 %v302, %v301
        %v316 = vpack.c.b16 %v304, %v303
        %v317 = vpack.c.b16 %v306, %v305
        %v318 = vpack.c.b16 %v308, %v307
        %v319 = vpack.c.b16 %v310, %v309
        %v320 = vpack.c.b16 %v312, %v311
        %v326 = vunpack.c.l.b16 %v272
        %v327 = vunpack.c.l.b16 %v273
        %v328 = vunpack.c.l.b16 %v274
        %v329 = vunpack.c.l.b16 %v275
        %v330 = vunpack.c.l.b16 %v276
        %v331 = vpack.c.b16 %v327, %v326
        %v332 = vpack.c.b16 %v329, %v328
        %v333 = vpack.c.b16 %v330, %v330
        %vm336 = vcmask 293888
        %v338 = vsel %vm336, %v313, 0
        %v341 = vsel %vm336, %v314, 0
        %v344 = vsel %vm336, %v315, 0
        %v347 = vsel %vm336, %v316, 0
        %v350 = vsel %vm336, %v317, 0
        %v353 = vsel %vm336, %v318, 0
        %v356 = vsel %vm336, %v319, 0
        %v359 = vsel %vm336, %v320, 0
        %vm361 = vcmask 1041408
        %v363 = vsel %vm361, %v333, 0
        %365 = vmatpush.bf16.msra.mxu0 0
        %366 = vmatpush.bf16.msra.mxu0 0
        %367 = vmatpush.bf16.msra.mxu0 0
        %368 = vmatpush.bf16.msra.mxu0 0
        %369 = vmatpush.bf16.msra.mxu0 0
        %370 = vmatpush.bf16.msra.mxu0 %v363
        %371 = vmatpush.bf16.msra.mxu0 %v332
        %372 = vmatpush.bf16.msra.mxu0 %v331
        %373 = vmatmul.bf16.gmra.mxu0 %v338
        %v374 = vpop.f32.mrf.mxu0
        %v375 = vadd.f32 %v279, %v374
        %v376 = vpop.f32.mrf.mxu0
        %v377 = vadd.f32 %v279, %v376
        %378 = vmatmul.bf16.gmra.mxu0 %v341
        %v379 = vpop.f32.mrf.mxu0
        %v380 = vadd.f32 %v279, %v379
        %v381 = vpop.f32.mrf.mxu0
        %v382 = vadd.f32 %v279, %v381
        %383 = vmatmul.bf16.gmra.mxu0 %v344
        %v384 = vpop.f32.mrf.mxu0
        %v385 = vadd.f32 %v279, %v384
        %v386 = vpop.f32.mrf.mxu0
        %v387 = vadd.f32 %v279, %v386
        %388 = vmatmul.bf16.gmra.mxu0 %v347
        %v389 = vpop.f32.mrf.mxu0
        %v390 = vadd.f32 %v279, %v389
        %v391 = vpop.f32.mrf.mxu0
        %v392 = vadd.f32 %v279, %v391
        %393 = vmatmul.bf16.gmra.mxu0 %v350
        %v394 = vpop.f32.mrf.mxu0
        %v395 = vadd.f32 %v279, %v394
        %v396 = vpop.f32.mrf.mxu0
        %v397 = vadd.f32 %v279, %v396
        %398 = vmatmul.bf16.gmra.mxu0 %v353
        %v399 = vpop.f32.mrf.mxu0
        %v400 = vadd.f32 %v279, %v399
        %v401 = vpop.f32.mrf.mxu0
        %v402 = vadd.f32 %v279, %v401
        %403 = vmatmul.bf16.gmra.mxu0 %v356
        %v404 = vpop.f32.mrf.mxu0
        %v405 = vadd.f32 %v279, %v404
        %v406 = vpop.f32.mrf.mxu0
        %v407 = vadd.f32 %v279, %v406
        %408 = vmatmul.bf16.gmra.mxu0 %v359
        %v409 = vpop.f32.mrf.mxu0
        %v410 = vadd.f32 %v279, %v409
        %v411 = vpop.f32.mrf.mxu0
        %v412 = vadd.f32 %v279, %v411
        %413 = vdwg.mxu0
        %v414 = vmax.f32 %v375, 0.0
        %v415 = vmax.f32 %v377, 0.0
        %v416 = vmax.f32 %v380, 0.0
        %v417 = vmax.f32 %v382, 0.0
        %v418 = vmax.f32 %v385, 0.0
        %v419 = vmax.f32 %v387, 0.0
        %v420 = vmax.f32 %v390, 0.0
        %v421 = vmax.f32 %v392, 0.0
        %v422 = vmax.f32 %v395, 0.0
        %v423 = vmax.f32 %v397, 0.0
        %v424 = vmax.f32 %v400, 0.0
        %v425 = vmax.f32 %v402, 0.0
        %v426 = vmax.f32 %v405, 0.0
        %v427 = vmax.f32 %v407, 0.0
        %v428 = vmax.f32 %v410, 0.0
        %v429 = vmax.f32 %v412, 0.0
        %v430 = vld [vmem:[#allocation2] sm:$0x1]
        %v431 = vadd.f32 %v414, %v415
        %v432 = vadd.f32 %v431, %v416
        %v433 = vadd.f32 %v432, %v417
        %v434 = vadd.f32 %v433, %v418
        %v435 = vadd.f32 %v434, %v419
        %v436 = vadd.f32 %v435, %v420
        %v437 = vadd.f32 %v436, %v421
        %v438 = vadd.f32 %v437, %v422
        %v439 = vadd.f32 %v438, %v423
        %v440 = vadd.f32 %v439, %v424
        %v441 = vadd.f32 %v440, %v425
        %v442 = vadd.f32 %v441, %v426
        %v443 = vadd.f32 %v442, %v427
        %v444 = vadd.f32 %v443, %v428
        %v445 = vadd.f32 %v444, %v429
        %v446 = vrot.slane %v445, 4
        %v447 = vadd.f32 %v445, %v446
        %v448 = vrot.slane %v447, 2
        %v449 = vadd.f32 %v447, %v448
        %v450 = vrot.slane %v449, 1
        %v451 = vadd.f32 %v449, %v450
        %v452 = vadd.f32 %v430, %v451
        %453 = vst [vmem:[#allocation2] sm:$0x1] %v452
        %p454 = scmp.eq.s32.totalorder %s24, 1
        // Predicated region
        $region45: #{tpu_custom_call.1} parent=39 // pred_check
          %p455 = pneg %p454
        $region46: #{tpu_custom_call.1} parent=39 // pred_check_branch
          %457 = sbr.rel (%p455) target = $region48
        $region47: #{tpu_custom_call.1} parent=39 // pred_region
          %v458 = vld [vmem:[#allocation2] sm:$0x1]
          %v459 = vmul.f32 %v458, 0.00390625
          %v460 = vld [vmem:[%s3] sm:$0xff]
          %v461 = vld [vmem:[%s3 + $0x8] sm:$0xff]
          %v462 = vld [vmem:[%s3 + $0x10] sm:$0xff]
          %v463 = vld [vmem:[%s3 + $0x18] sm:$0xff]
          %v464 = vld [vmem:[%s3 + $0x20] sm:$0xff]
          %v465 = vld [vmem:[%s3 + $0x28] sm:$0xff]
          %v466 = vld [vmem:[%s3 + $0x30] sm:$0xff]
          %v467 = vld [vmem:[%s3 + $0x38] sm:$0xff]
          %v468 = vld [vmem:[%s3 + $0x40] sm:$0xff]
          %v469 = vld [vmem:[%s3 + $0x48] sm:$0xff]
          %v470 = vld [vmem:[%s3 + $0x50] sm:$0xff]
          %v471 = vld [vmem:[%s3 + $0x58] sm:$0xff]
          %v472 = vld [vmem:[%s3 + $0x60] sm:$0xff]
          %v473 = vld [vmem:[%s3 + $0x68] sm:$0xff]
          %v474 = vld [vmem:[%s3 + $0x70] sm:$0xff]
          %v475 = vld [vmem:[%s3 + $0x78] sm:$0xff]
          %v476 = vld [vmem:[%s4] sm:$0x1]
          %477 = vmatpush.msra.mxu0 %v475
          %478 = vmatpush.msra.mxu0 %v474
          %479 = vmatpush.msra.mxu0 %v473
          %480 = vmatpush.msra.mxu0 %v472
          %481 = vmatpush.msra.mxu0 %v471
          %482 = vmatpush.msra.mxu0 %v470
          %483 = vmatpush.msra.mxu0 %v469
          %484 = vmatpush.msra.mxu0 %v468
          %485 = vmatpush.msra.mxu0 %v467
          %486 = vmatpush.msra.mxu0 %v466
          %487 = vmatpush.msra.mxu0 %v465
          %488 = vmatpush.msra.mxu0 %v464
          %489 = vmatpush.msra.mxu0 %v463
          %490 = vmatpush.msra.mxu0 %v462
          %491 = vmatpush.msra.mxu0 %v461
          %492 = vmatpush.msra.mxu0 %v460
          %493 = vmatmul.f32.gmra.mxu0 %v459
          %v494 = vpop.f32.mrf.mxu0
          %v495 = vadd.f32 %v476, %v494
          %496 = vdwg.mxu0
          %497 = vst [vmem:[%s239] sm:$0x1] %v495
        $region48: #{tpu_custom_call.1} parent=39 // pred_fallthru
          _
        %s498 = sand.u32 %s153, 1
        %s499 = scalar_lea.sflag [#allocation4], %s498
        %s500 = sand.u32 %s153, 1
        %s501 = scalar_lea.vmem [#allocation3], %s500
        // Predicated region
        $region49: #{tpu_custom_call.1} parent=39 // pred_check
          %p502 = pneg %p163
        $region50: #{tpu_custom_call.1} parent=39 // pred_check_branch
          %504 = sbr.rel (%p502) target = $region52
        $region51: #{tpu_custom_call.1} parent=39 // pred_region
          %506 = vsyncadd %s499, 0
          %s507 = scalar_lea.hbm %s5, %s23
          %s509 = sshll.u32 %s501, 4
          %s510 = int_to_ptr.vmem [resolvable:$true] %s509
          %s511 = sshll.u32 %s507, 4
          %s512 = int_to_ptr.hbm [resolvable:$true] %s511
          %514 = dma.vmem_to_hbm [thread:$0]  %s510, 16, %s512, %s499
        $region52: #{tpu_custom_call.1} parent=39 // pred_fallthru
          _
      $region40: #{tpu_custom_call.1} parent=5 // pred_fallthru
        _
      %p515 = scmp.le.s32.totalorder 2, %s14
      // Predicated region
      $region53: #{tpu_custom_call.1} parent=5 // pred_check
        %p516 = pneg %p515
      $region54: #{tpu_custom_call.1} parent=5 // pred_check_branch
        %518 = sbr.rel (%p516) target = $region56
      $region55: #{tpu_custom_call.1} parent=5 // pred_region
        %s519 = ssub.s32 %s14, 2
        // Predicated region
        $region57: #{tpu_custom_call.1} parent=55 // pred_check
          %p520 = pneg %p169
        $region58: #{tpu_custom_call.1} parent=55 // pred_check_branch
          %522 = sbr.rel (%p520) target = $region60
        $region59: #{tpu_custom_call.1} parent=55 // pred_region
          %s523 = sand.u32 %s154, 1
          %s524 = scalar_lea.sflag [#allocation4], %s523
          %s525 = sand.u32 %s154, 1
          %s526 = scalar_lea.vmem [#allocation3], %s525
          %528 = dma.done %s524, 16
        $region60: #{tpu_custom_call.1} parent=55 // pred_fallthru
          _
      $region56: #{tpu_custom_call.1} parent=5 // pred_fallthru
        _
    $region6: #{tpu_custom_call.1} parent=1 // loop_footer
      %s18 = sadd.s32 1, %s14
    $region7: #{tpu_custom_call.1} parent=1 // loop_footer_branch
      %13 = sbr.rel target = $region3
    $region8: #{tpu_custom_call.1} parent=1 // loop_exit
      _
    %529 = vsyncpa [#allocation4], 1
    %s530 = scalar_lea.sflag [#allocation4], 1
    %531 = vsyncpa %s530, 1

</llo_original>
